<compile_context>
chip_gen: v5e
topology: v5e:2x2
jax: 0.10.0
libtpu: 0.0.40
codegen_flags: <defaults>
</compile_context>

<pallas_src>
import jax
import jax.numpy as jnp
from jax.experimental import pallas as pl
from jax.experimental.pallas import tpu as pltpu


def _affine_kernel(x_ref, a_ref, b_ref, o_ref):
    # x_ref : (rb, lb) block of the flattened video, in its input dtype
    # a_ref : (rb, 1) f32 per-row multiplier  (1 / (scale * std[channel]))
    # b_ref : (rb, 1) f32 per-row bias        (-mean[channel] / std[channel])
    # o_ref : (rb, lb) f32 output block
    x = x_ref[...].astype(jnp.float32)          # on-chip cast (uint8 -> f32)
    o_ref[...] = x * a_ref[...] + b_ref[...]    # one VPU mul + add per elem


def _pick_blocks(num_rows, num_lanes, in_itemsize):
    """Lane-dense blocks with a bounded, double-buffered VMEM footprint."""
    MAX_LANE_BLOCK = 4096           # multiple of 128 -> unmasked full-width vst
    ROW_ALIGN = 32                  # sublane-tiling-safe for 8/16/32-bit dtypes
    VMEM_BUDGET = 4 * 1024 * 1024   # target bytes for (in + out) * 2 buffers

    lb = num_lanes if num_lanes <= MAX_LANE_BLOCK else MAX_LANE_BLOCK
    per_row_bytes = lb * (4 + in_itemsize) * 2      # 2-deep pipeline, in + out
    target_rows = max(1, VMEM_BUDGET // per_row_bytes)
    if num_rows <= target_rows or num_rows <= ROW_ALIGN:
        rb = num_rows                               # full dim: always legal
    else:
        rb = min(num_rows,
                 max(ROW_ALIGN, (target_rows // ROW_ALIGN) * ROW_ALIGN))
    return rb, lb


def video_normalize(video,
                    mean=(0.485, 0.456, 0.406),
                    std=(0.229, 0.224, 0.225)):
    """Pallas TPU equivalent of VideoNormalizer.forward. Returns NCHW f32."""
    mean = jnp.asarray(mean, jnp.float32)
    std = jnp.asarray(std, jnp.float32)

    # uint8 inputs are scaled by 255.0; this is a trace-time constant folded
    # into the per-channel multiplier, so the uint8 bytes stream straight
    # into the kernel and no wrapper-level f32 copy is materialized in HBM.
    scale = 255.0 if video.dtype == jnp.uint8 else 1.0

    # Layout handling mirrors the PyTorch module exactly: (dim1==3, last!=3)
    # means NCHW; everything else is treated as channels-last (normalize over
    # the last dim).  NOTE: like the original module this is ambiguous for
    # inputs where both dim1 and the last dim are (not) 3.
    if video.shape[-1] != 3 and video.shape[1] == 3:
        nchw = video
    else:
        # TODO(synk): the NHWC->NCHW permute is left to an XLA transpose (done
        # while the data is still in its narrow input dtype) rather than fused
        # into the kernel, to avoid an in-kernel cross-lane relayout.
        nchw = jnp.transpose(video, (0, 3, 1, 2))

    N, C, H, W = nchw.shape
    R, L = N * C, H * W
    x2d = nchw.reshape(R, L)                        # contiguous: free reshape

    # Fold (x/scale - mean)/std into a single per-channel multiply-add.
    a_c = (1.0 / (scale * std)).astype(jnp.float32)      # (C,)
    b_c = (-(mean / std)).astype(jnp.float32)            # (C,)
    a_rows = jnp.tile(a_c, N).reshape(R, 1)              # row r -> channel r%C
    b_rows = jnp.tile(b_c, N).reshape(R, 1)

    rb, lb = _pick_blocks(R, L, jnp.dtype(x2d.dtype).itemsize)

    out2d = pl.pallas_call(
        _affine_kernel,
        out_shape=jax.ShapeDtypeStruct((R, L), jnp.float32),
        grid=(pl.cdiv(R, rb), pl.cdiv(L, lb)),
        in_specs=[
            pl.BlockSpec((rb, lb), lambda i, j: (i, j)),   # video block
            pl.BlockSpec((rb, 1), lambda i, j: (i, 0)),    # per-row multiplier
            pl.BlockSpec((rb, 1), lambda i, j: (i, 0)),    # per-row bias
        ],
        out_specs=pl.BlockSpec((rb, lb), lambda i, j: (i, j)),
        compiler_params=pltpu.CompilerParams(
            dimension_semantics=("parallel", "parallel")),
    )(x2d, a_rows, b_rows)

    return out2d.reshape(N, C, H, W)


if __name__ == "__main__":
    key = jax.random.PRNGKey(0)

    # Deterministic parameters (same defaults as the PyTorch module __init__).
    mean = [0.485, 0.456, 0.406]
    std = [0.229, 0.224, 0.225]

    # --- uint8 NCHW path (the standard VideoNormalizer use-case) ---
    x_u8 = jax.random.randint(
        key, (2, 3, 16, 16), 0, 256, dtype=jnp.int32).astype(jnp.uint8)
    out = jax.block_until_ready(video_normalize(x_u8, mean, std))

    # Pure-JAX reference of the PyTorch forward.
    v = x_u8.astype(jnp.float32) / 255.0              # uint8 branch
    v = jnp.transpose(v, (0, 2, 3, 1))                # NCHW -> NHWC
    v = (v - jnp.asarray(mean, jnp.float32)) / jnp.asarray(std, jnp.float32)
    ref = jnp.transpose(v, (0, 3, 1, 2))              # NHWC -> NCHW

    assert out.shape == (2, 3, 16, 16)
    assert out.dtype == jnp.float32
    assert jnp.allclose(out, ref, atol=1e-5, rtol=1e-5)

    # --- float NHWC path ---
    x_f = jax.random.uniform(key, (2, 16, 16, 3), dtype=jnp.float32)
    out2 = jax.block_until_ready(video_normalize(x_f, mean, std))
    ref2 = jnp.transpose(
        (x_f - jnp.asarray(mean, jnp.float32)) / jnp.asarray(std, jnp.float32),
        (0, 3, 1, 2))
    assert out2.shape == (2, 3, 16, 16)
    assert out2.dtype == jnp.float32
    assert jnp.allclose(out2, ref2, atol=1e-5, rtol=1e-5)

    print("KERNEL_OK")
</pallas_src>

<mosaic_0001>
module attributes {stable_mosaic.version = 11 : i64} {
  func.func @_affine_kernel(%arg0: i32, %arg1: i32, %arg2: memref<6x256xi8, #tpu.memory_space<vmem>>, %arg3: memref<6x1xf32, #tpu.memory_space<vmem>>, %arg4: memref<6x1xf32, #tpu.memory_space<vmem>>, %arg5: memref<6x256xf32, #tpu.memory_space<vmem>>) attributes {dimension_semantics = [#tpu.dimension_semantics<parallel>, #tpu.dimension_semantics<parallel>], iteration_bounds = array<i64: 1, 1>, scalar_prefetch = 0 : i64, scratch_operands = 0 : i64, tpu.core_type = #tpu.core_type<tc>, window_params = [{transform_indices = @transform_0, window_bounds = array<i64: 6, 256>}, {transform_indices = @transform_1, window_bounds = array<i64: 6, 1>}, {transform_indices = @transform_2, window_bounds = array<i64: 6, 1>}, {transform_indices = @transform_3, window_bounds = array<i64: 6, 256>}]} {
    %c0 = arith.constant 0 : index
    %c0_0 = arith.constant 0 : index
    %0 = vector.load %arg2[%c0, %c0_0] : memref<6x256xi8, #tpu.memory_space<vmem>>, vector<6x256xi8>
    %1 = arith.uitofp %0 : vector<6x256xi8> to vector<6x256xf32>
    %c0_1 = arith.constant 0 : index
    %c0_2 = arith.constant 0 : index
    %2 = vector.load %arg3[%c0_1, %c0_2] : memref<6x1xf32, #tpu.memory_space<vmem>>, vector<6x1xf32>
    %3 = vector.broadcast %2 : vector<6x1xf32> to vector<6x256xf32>
    %4 = arith.mulf %1, %3 : vector<6x256xf32>
    %c0_3 = arith.constant 0 : index
    %c0_4 = arith.constant 0 : index
    %5 = vector.load %arg4[%c0_3, %c0_4] : memref<6x1xf32, #tpu.memory_space<vmem>>, vector<6x1xf32>
    %6 = vector.broadcast %5 : vector<6x1xf32> to vector<6x256xf32>
    %7 = arith.addf %4, %6 : vector<6x256xf32>
    %c0_5 = arith.constant 0 : index
    %c0_6 = arith.constant 0 : index
    %8 = vector.load %arg5[%c0_5, %c0_6] : memref<6x256xf32, #tpu.memory_space<vmem>>, vector<6x256xf32>
    tpu.vector_store %arg5[%c0_5, %c0_6], %7 {strides = array<i32>} : memref<6x256xf32, #tpu.memory_space<vmem>>, vector<6x256xf32>,
    return
  }
  func.func @transform_0(%arg0: i32, %arg1: i32) -> (i32, i32) {
    %c0_i32 = arith.constant 0 : i32
    return %arg0, %arg1 : i32, i32
  }
  func.func @transform_1(%arg0: i32, %arg1: i32) -> (i32, i32) {
    %c0_i32 = arith.constant 0 : i32
    %c0_i32_0 = arith.constant 0 : i32
    return %arg0, %c0_i32 : i32, i32
  }
  func.func @transform_2(%arg0: i32, %arg1: i32) -> (i32, i32) {
    %c0_i32 = arith.constant 0 : i32
    %c0_i32_0 = arith.constant 0 : i32
    return %arg0, %c0_i32 : i32, i32
  }
  func.func @transform_3(%arg0: i32, %arg1: i32) -> (i32, i32) {
    %c0_i32 = arith.constant 0 : i32
    return %arg0, %arg1 : i32, i32
  }
}

</mosaic_0001>

<llo_original>
// kernel: tpu_custom_call.1
$region0: #{tpu_custom_call.1}
  #allocation0 [shape = 'u32[]', space=smem, size = 0x4, offset = 0x4, fixed_abs, tag = 'smem constant byte address 0x4 - core index']
  #allocation1 [shape = 'u32[72,128]{1,0:T(1,128)}', space=vmem, size = 0x9000, scoped, tag = 'internal scratch']
  %s0 = inlined_call_operand.vmem [shape: u8[6,256], index: 0, kind: input, shape index: {}]
  %s1 = inlined_call_operand.vmem [shape: f32[6,1], index: 1, kind: input, shape index: {}]
  %s2 = inlined_call_operand.vmem [shape: f32[6,1], index: 2, kind: input, shape index: {}]
  %s3 = inlined_call_operand.hbm [shape: f32[6,256], index: 3, kind: output, shape index: {}]
  %s4 = sld [smem:[#allocation0]]
  $region22: #{tpu_custom_call.1} parent=0
    _
  %s6 = ssub.s32 1, %s4
  %s7 = scalar_select 0, %s6, %s4
  $region1: #{tpu_custom_call.1} parent=0
    #allocation2 [shape = 'u8[8192]{0}', space=vmem, size = 0x2000, scoped, tag = 'output window, operand 0, single buffered']
    #allocation3 [shape = 's32[1]{0}', space=sflag, size = 0x4, scoped, tag = 'scoped memory for tpu_custom_call.1']
    %8 = vsyncpa [#allocation3], 0
    // Predicated region
    $region2: #{tpu_custom_call.1} parent=1 // pred_check
      _
    $region3: #{tpu_custom_call.1} parent=1 // pred_check_branch
      %10 = sbr.rel (0) target = $region5
    $region4: #{tpu_custom_call.1} parent=1 // pred_region
      _
    $region5: #{tpu_custom_call.1} parent=1 // pred_fallthru
      _
    // Predicated region
    $region6: #{tpu_custom_call.1} parent=1 // pred_check
      _
    $region7: #{tpu_custom_call.1} parent=1 // pred_check_branch
      %12 = sbr.rel (0) target = $region9
    $region8: #{tpu_custom_call.1} parent=1 // pred_region
      _
    $region9: #{tpu_custom_call.1} parent=1 // pred_fallthru
      _
    // Predicated region
    $region10: #{tpu_custom_call.1} parent=1 // pred_check
      _
    $region11: #{tpu_custom_call.1} parent=1 // pred_check_branch
      %14 = sbr.rel (0) target = $region13
    $region12: #{tpu_custom_call.1} parent=1 // pred_region
      _
    $region13: #{tpu_custom_call.1} parent=1 // pred_fallthru
      _
    %v15 = vld [vmem:[%s0] sm:$0xf]
    %v16 = vunpack.c.0.s8 %v15
    %v17 = vunpack.c.1.s8 %v15
    %v18 = vand.u32 %v16, 255
    %v19 = vand.u32 %v17, 255
    %v20 = vcvt.s32.f32 %v18
    %v21 = vcvt.s32.f32 %v19
    %v22 = vld [vmem:[%s1] sm:$0x3f]
    %24 = vset.pattern.permute.xlu0 0
    %25 = vperm.xlu0 %24, %v22
    %v26 = vpop.permute.xlu0 %25
    %v28 = vmul.f32 %v20, %v26
    %v29 = vmul.f32 %v21, %v26
    %v30 = vld [vmem:[%s2] sm:$0x3f]
    %32 = vset.pattern.permute.xlu0 0
    %33 = vperm.xlu0 %32, %v30
    %v34 = vpop.permute.xlu0 %33
    %v36 = vadd.f32 %v28, %v34
    %v37 = vadd.f32 %v29, %v34
    %38 = vst [vmem:[#allocation2] sm:$0x3f] %v36
    %39 = vst [vmem:[#allocation2 + $0x8] sm:$0x3f] %v37
    // Predicated region
    $region14: #{tpu_custom_call.1} parent=1 // pred_check
      _
    $region15: #{tpu_custom_call.1} parent=1 // pred_check_branch
      %41 = sbr.rel (0) target = $region17
    $region16: #{tpu_custom_call.1} parent=1 // pred_region
      %43 = vsyncadd [#allocation3], 0
      %s45 = sshll.u32 [#allocation2], 4
      %s46 = int_to_ptr.vmem [resolvable:$true] %s45
      %s47 = sshll.u32 %s3, 4
      %s48 = int_to_ptr.hbm [resolvable:$true] %s47
      %50 = dma.vmem_to_hbm [thread:$0]  %s46, 256, %s48, [#allocation3]
    $region17: #{tpu_custom_call.1} parent=1 // pred_fallthru
      _
    // Predicated region
    $region18: #{tpu_custom_call.1} parent=1 // pred_check
      _
    $region19: #{tpu_custom_call.1} parent=1 // pred_check_branch
      %52 = sbr.rel (0) target = $region21
    $region20: #{tpu_custom_call.1} parent=1 // pred_region
      %54 = dma.done [#allocation3], 256
    $region21: #{tpu_custom_call.1} parent=1 // pred_fallthru
      _
    %55 = vsyncpa [#allocation3], 1

</llo_original>
